<compile_context>
chip_gen: v7x
topology: tpu7x:2x2x1
jax: 0.10.0
libtpu: 0.0.40
codegen_flags: <defaults>
</compile_context>

<pallas_src>
import jax
import jax.numpy as jnp
from jax.experimental import pallas as pl
from jax.experimental.pallas import tpu as pltpu


_SMALL_INPUT_BYTES = 1 << 20  # below this, skip the Pallas launch entirely


def _chunk_ranges(leading, num_chunks):
    """Static (start, stop) row ranges splitting `leading` rows into chunks."""
    base, rem = divmod(leading, num_chunks)
    ranges = []
    start = 0
    for i in range(num_chunks):
        stop = start + base + (1 if i < rem else 0)
        if stop > start:
            ranges.append((start, stop))
        start = stop
    return ranges


def _default_num_chunks(nbytes, leading):
    # v5e (~0.8 TB/s): one DMA stream saturates HBM -> single copy.
    # v6e (~1.4 TB/s) / v7x (~3.2 TB/s): a few concurrent descriptors get a
    # large read+write copy closer to the HBM roofline.  Size-gated so small
    # copies never pay per-descriptor / scalar-issue overhead.
    if leading < 2:
        return 1
    if nbytes >= (64 << 20):
        target = 8
    elif nbytes >= (16 << 20):
        target = 4
    elif nbytes >= (4 << 20):
        target = 2
    else:
        target = 1
    return max(1, min(target, leading))


def _make_identity_kernel(ranges):
    """Kernel issuing one HBM->HBM DMA per static row range (or one whole-array DMA)."""
    if ranges is None:
        def kernel(x_hbm_ref, o_hbm_ref, copy_sem):
            copy = pltpu.make_async_copy(x_hbm_ref, o_hbm_ref, copy_sem)
            copy.start()
            copy.wait()
        return kernel, pltpu.SemaphoreType.DMA(())

    def kernel(x_hbm_ref, o_hbm_ref, copy_sems):
        copies = [
            pltpu.make_async_copy(
                x_hbm_ref.at[lo:hi], o_hbm_ref.at[lo:hi], copy_sems.at[i]
            )
            for i, (lo, hi) in enumerate(ranges)
        ]
        # Issue every descriptor first (all outstanding), then wait on all.
        for c in copies:
            c.start()
        for c in copies:
            c.wait()

    return kernel, pltpu.SemaphoreType.DMA((len(ranges),))


def _identity_pallas_copy(x, *, num_chunks=None):
    """Identity as a pure HBM->HBM DMA copy (no VMEM staging, no tiling)."""
    nbytes = x.size * x.dtype.itemsize
    leading = x.shape[0] if x.ndim >= 1 else 1
    if num_chunks is None:
        num_chunks = _default_num_chunks(nbytes, leading)
    if x.ndim < 1:
        num_chunks = 1
    num_chunks = max(1, min(num_chunks, leading))

    ranges = _chunk_ranges(leading, num_chunks) if num_chunks > 1 else None
    kernel, sem_shape = _make_identity_kernel(ranges)

    return pl.pallas_call(
        kernel,
        out_shape=jax.ShapeDtypeStruct(x.shape, x.dtype),
        in_specs=[pl.BlockSpec(memory_space=pl.ANY)],
        out_specs=pl.BlockSpec(memory_space=pl.ANY),
        scratch_shapes=[sem_shape],
        cost_estimate=pl.CostEstimate(
            flops=0, transcendentals=0, bytes_accessed=2 * nbytes
        ),
    )(x)


def _identity_alias_kernel(x_hbm_ref, o_hbm_ref):
    # Input and output alias the same HBM buffer: nothing to move.
    del x_hbm_ref, o_hbm_ref


def identity_pallas_inplace(x):
    """Zero-copy identity via buffer aliasing.

    Only meaningful when the caller donates x, e.g.
    jax.jit(identity_pallas_inplace, donate_argnums=0)(x); gives up the
    "fresh output buffer" semantics of the copying variant.
    """
    return pl.pallas_call(
        _identity_alias_kernel,
        out_shape=jax.ShapeDtypeStruct(x.shape, x.dtype),
        in_specs=[pl.BlockSpec(memory_space=pl.ANY)],
        out_specs=pl.BlockSpec(memory_space=pl.ANY),
        input_output_aliases={0: 0},
        cost_estimate=pl.CostEstimate(flops=0, transcendentals=0, bytes_accessed=0),
    )(x)


def identity_pallas(x):
    """Identity forward pass: y = x.

    Tiny inputs skip the Pallas launch (XLA's native async copy is cheaper);
    large inputs are copied by one or a few concurrent HBM->HBM DMAs.
    """
    nbytes = x.size * x.dtype.itemsize
    if nbytes < _SMALL_INPUT_BYTES:
        return jnp.copy(x)
    return _identity_pallas_copy(x)


if __name__ == "__main__":
    # Identity wraps nn.Identity() by default (model=None): no parameters.
    key = jax.random.PRNGKey(0)
    x = jax.random.normal(key, (2, 4, 16, 16), dtype=jnp.float32)  # NCHW

    # 1) Force the Pallas DMA kernel (single whole-array descriptor).
    y_kernel = jax.block_until_ready(_identity_pallas_copy(x))
    assert y_kernel.shape == x.shape and y_kernel.dtype == x.dtype
    assert bool(jnp.array_equal(y_kernel, x))

    # 2) Exercise the chunked-descriptor path used for large arrays on v6e/v7x.
    y_chunked = jax.block_until_ready(_identity_pallas_copy(x, num_chunks=2))
    assert bool(jnp.array_equal(y_chunked, x))

    # 3) Public wrapper: the 8 KiB test tensor takes the small-input fast path.
    y = jax.block_until_ready(identity_pallas(x))
    assert y.shape == x.shape and y.dtype == x.dtype
    assert bool(jnp.array_equal(y, x))

    print("KERNEL_OK")
</pallas_src>

<mosaic_0001>
module attributes {stable_mosaic.version = 11 : i64} {
  func.func @kernel(%arg0: memref<2x4x16x16xf32, #tpu.memory_space<any>>, %arg1: memref<2x4x16x16xf32, #tpu.memory_space<any>>, %arg2: memref<!tpu.dma_semaphore, #tpu.memory_space<semaphore_mem>>) attributes {dimension_semantics = [], scalar_prefetch = 0 : i64, scratch_operands = 1 : i64, tpu.core_type = #tpu.core_type<tc>} {
    tpu.enqueue_dma source(%arg0 : memref<2x4x16x16xf32, #tpu.memory_space<any>>) target(%arg1 : memref<2x4x16x16xf32, #tpu.memory_space<any>>) target_semaphore(%arg2 : memref<!tpu.dma_semaphore, #tpu.memory_space<semaphore_mem>>)
    tpu.wait_dma2 semaphore(%arg2 : memref<!tpu.dma_semaphore, #tpu.memory_space<semaphore_mem>>) src(%arg0 : memref<2x4x16x16xf32, #tpu.memory_space<any>>) dst(%arg1 : memref<2x4x16x16xf32, #tpu.memory_space<any>>)
    return
  }
}

</mosaic_0001>

<llo_original>
// kernel: tpu_custom_call.1
$region0: #{tpu_custom_call.1}
  #allocation0 [shape = 'u32[]', space=smem, size = 0x4, offset = 0x4, fixed_abs, tag = 'smem constant byte address 0x4 - core index']
  #allocation1 [shape = 'u32[144,128]{1,0:T(1,128)}', space=vmem, size = 0x12000, scoped, tag = 'internal scratch']
  #allocation2 [shape = 's32[1]{0}', space=sflag, size = 0x4, scoped, tag = 'scratch operand']
  #allocation3 [shape = 's32[]', space=sflag, size = 0x4, offset = 0, fixed_abs, tag = 'sflag constant byte address 0x0 - dummy sync flag']
  #allocation4 [shape = 'u32[0]{0}', space=smem, size = 0, offset = 0, fixed_abs, tag = 'smem constant byte address 0x0 - null']
  %s0 = inlined_call_operand.hbm [shape: f32[2,4,16,16], index: 0, kind: input, shape index: {}]
  %s1 = inlined_call_operand.hbm [shape: f32[2,4,16,16], index: 1, kind: output, shape index: {}]
  %s2 = sld [smem:[#allocation0]]
  $region2: #{tpu_custom_call.1} parent=0
    _
  %s4 = ssub.s32 1, %s2
  %s5 = scalar_select 0, %s4, %s2
  %s7 = sshll.u32 1, 14
  %s8 = sxor.u32 4294967295, %s7
  %s11 = sshll.u32 3, 24
  %s12 = sxor.u32 4294967295, %s11
  %s13 = sand.u32 0, %s12
  %s15 = sor.u32 %s13, 0
  %18 = dma.general %s0, 2048, %s1, [#allocation2], [#allocation3], [#allocation4], %s15, 0
  %s19 = smul.u32 2, 4
  %s20 = smul.u32 %s19, 16
  %s21 = smul.u32 %s20, 1
  %s22 = sshll.u32 %s21, 4
  %23 = dma.done [#allocation2], %s22
  %24 = vsyncmov [#allocation2]
  %s25 = vpop.sfrf %24
  %p26 = scmp.eq.s32.totalorder %s25, 0
  %p27 = pneg %p26
  %29 = shalt.err (%p27)

</llo_original>
